<compile_context>
chip_gen: v7x
topology: tpu7x:2x2x1
jax: 0.10.0
libtpu: 0.0.40
codegen_flags: <defaults>
</compile_context>

<pallas_src>
import jax
import jax.numpy as jnp
from jax import lax
from jax.experimental import pallas as pl
from jax.experimental.pallas import tpu as pltpu


def pooler_kernel(x_ref, w_ref, b_ref, o_ref):
    """pooled = tanh(x @ W^T + b) for one (tm, tn) output tile.

    x_ref: [tm, H]   first-token activations
    w_ref: [tn, H]   dense weight rows (PyTorch [out, in] layout)
    b_ref: [1, tn]   dense bias slice
    o_ref: [tm, tn]  output tile
    """
    y = lax.dot_general(
        x_ref[...], w_ref[...],
        dimension_numbers=(((1,), (1,)), ((), ())),   # contract H_in of both
        preferred_element_type=jnp.float32,
        precision=lax.Precision.HIGHEST)
    o_ref[...] = jnp.tanh(y + b_ref[...]).astype(o_ref.dtype)


def _pick_tile(dim, candidates):
    for t in candidates:
        if t <= dim and dim % t == 0:
            return t
    return dim  # full extent (small / non-dividing dims)


def bert_pooler(hidden_states, dense_w, dense_b, *, tm=None, tn=None):
    """hidden_states: [B, S, H]; dense_w: [H, H] (PyTorch [out, in]); dense_b: [H]."""
    B, S, H = hidden_states.shape
    out_dtype = hidden_states.dtype

    # First-token slice in the wrapper: B*H elements, negligible vs. the matmul.
    x = hidden_states[:, 0, :]                       # [B, H]
    b2d = dense_b.reshape(1, H)

    # Tile rows and output columns; keep contraction axis H whole.
    if tm is None:
        tm = _pick_tile(B, (256, 128, 64, 32, 16, 8))
    if tn is None:
        tn = _pick_tile(H, (512, 256, 128))
    grid = (pl.cdiv(B, tm), pl.cdiv(H, tn))

    return pl.pallas_call(
        pooler_kernel,
        out_shape=jax.ShapeDtypeStruct((B, H), out_dtype),
        grid=grid,
        in_specs=[
            pl.BlockSpec((tm, H), lambda i, j: (i, 0)),   # activations (row tile)
            pl.BlockSpec((tn, H), lambda i, j: (j, 0)),   # weight rows for out cols j
            pl.BlockSpec((1, tn), lambda i, j: (0, j)),   # bias slice
        ],
        out_specs=pl.BlockSpec((tm, tn), lambda i, j: (i, j)),
        compiler_params=pltpu.CompilerParams(
            dimension_semantics=("parallel", "parallel")),
    )(x, dense_w, b2d)


def init_params(key, hidden_size):
    k_w, _ = jax.random.split(key)
    scale = 0.02
    return {
        # nn.Linear(H, H): weight [out, in], bias [out]
        "dense_w": scale * jax.random.normal(k_w, (hidden_size, hidden_size), jnp.float32),
        "dense_b": jnp.zeros((hidden_size,), jnp.float32),
    }


def _reference(hidden_states, params):
    # Pure-JAX reference mirroring the PyTorch forward.
    first_token = hidden_states[:, 0]
    y = jnp.dot(first_token, params["dense_w"].T,
                precision=lax.Precision.HIGHEST) + params["dense_b"]
    return jnp.tanh(y)


if __name__ == "__main__":
    B, S, H = 2, 8, 32

    key = jax.random.PRNGKey(0)
    k_x, k_p = jax.random.split(key)

    hidden_states = jax.random.normal(k_x, (B, S, H), jnp.float32)
    params = init_params(k_p, H)

    pooled = bert_pooler(hidden_states, params["dense_w"], params["dense_b"])
    jax.block_until_ready(pooled)

    ref = _reference(hidden_states, params)
    assert pooled.shape == (B, H)
    assert jnp.allclose(pooled, ref, atol=1e-4, rtol=1e-4)

    print("KERNEL_OK")
</pallas_src>

<mosaic_0001>
module attributes {stable_mosaic.version = 11 : i64} {
  func.func @pooler_kernel(%arg0: i32, %arg1: i32, %arg2: memref<2x32xf32, #tpu.memory_space<vmem>>, %arg3: memref<32x32xf32, #tpu.memory_space<vmem>>, %arg4: memref<1x32xf32, #tpu.memory_space<vmem>>, %arg5: memref<2x32xf32, #tpu.memory_space<vmem>>) attributes {dimension_semantics = [#tpu.dimension_semantics<parallel>, #tpu.dimension_semantics<parallel>], iteration_bounds = array<i64: 1, 1>, scalar_prefetch = 0 : i64, scratch_operands = 0 : i64, tpu.core_type = #tpu.core_type<tc>, window_params = [{transform_indices = @transform_0, window_bounds = array<i64: 2, 32>}, {transform_indices = @transform_1, window_bounds = array<i64: 32, 32>}, {transform_indices = @transform_2, window_bounds = array<i64: 1, 32>}, {transform_indices = @transform_3, window_bounds = array<i64: 2, 32>}]} {
    %c0 = arith.constant 0 : index
    %c0_0 = arith.constant 0 : index
    %0 = vector.load %arg2[%c0, %c0_0] : memref<2x32xf32, #tpu.memory_space<vmem>>, vector<2x32xf32>
    %c0_1 = arith.constant 0 : index
    %c0_2 = arith.constant 0 : index
    %1 = vector.load %arg3[%c0_1, %c0_2] : memref<32x32xf32, #tpu.memory_space<vmem>>, vector<32x32xf32>
    %cst = arith.constant dense<0.000000e+00> : vector<2x32xf32>
    %2 = tpu.matmul %0, %1, %cst {dimension_numbers = #tpu.dot_dimension_numbers<[1], [1], [0], [0], [0, 0, 1, 0], [], []>, precision = #tpu.contract_precision<fp32>} : vector<2x32xf32>, vector<32x32xf32>, vector<2x32xf32> -> vector<2x32xf32>
    %c0_3 = arith.constant 0 : index
    %c0_4 = arith.constant 0 : index
    %3 = vector.load %arg4[%c0_3, %c0_4] : memref<1x32xf32, #tpu.memory_space<vmem>>, vector<1x32xf32>
    %4 = vector.broadcast %3 : vector<1x32xf32> to vector<2x32xf32>
    %5 = arith.addf %2, %4 : vector<2x32xf32>
    %6 = math.tanh %5 : vector<2x32xf32>
    %c0_5 = arith.constant 0 : index
    %c0_6 = arith.constant 0 : index
    %7 = vector.load %arg5[%c0_5, %c0_6] : memref<2x32xf32, #tpu.memory_space<vmem>>, vector<2x32xf32>
    tpu.vector_store %arg5[%c0_5, %c0_6], %6 {strides = array<i32>} : memref<2x32xf32, #tpu.memory_space<vmem>>, vector<2x32xf32>,
    return
  }
  func.func @transform_0(%arg0: i32, %arg1: i32) -> (i32, i32) {
    %c0_i32 = arith.constant 0 : i32
    %c0_i32_0 = arith.constant 0 : i32
    return %arg0, %c0_i32 : i32, i32
  }
  func.func @transform_1(%arg0: i32, %arg1: i32) -> (i32, i32) {
    %c0_i32 = arith.constant 0 : i32
    %c0_i32_0 = arith.constant 0 : i32
    return %arg1, %c0_i32 : i32, i32
  }
  func.func @transform_2(%arg0: i32, %arg1: i32) -> (i32, i32) {
    %c0_i32 = arith.constant 0 : i32
    %c0_i32_0 = arith.constant 0 : i32
    return %c0_i32, %arg1 : i32, i32
  }
  func.func @transform_3(%arg0: i32, %arg1: i32) -> (i32, i32) {
    %c0_i32 = arith.constant 0 : i32
    return %arg0, %arg1 : i32, i32
  }
}

</mosaic_0001>

<llo_original>
// kernel: tpu_custom_call.1
$region0: #{tpu_custom_call.1}
  #allocation0 [shape = 'u32[]', space=smem, size = 0x4, offset = 0x4, fixed_abs, tag = 'smem constant byte address 0x4 - core index']
  #allocation1 [shape = 'u32[144,128]{1,0:T(1,128)}', space=vmem, size = 0x12000, scoped, tag = 'internal scratch']
  %s0 = inlined_call_operand.hbm [shape: f32[2,32], index: 0, kind: input, shape index: {}]
  %s1 = inlined_call_operand.hbm [shape: f32[32,32], index: 1, kind: input, shape index: {}]
  %s2 = inlined_call_operand.vmem [shape: f32[1,32], index: 2, kind: input, shape index: {}]
  %s3 = inlined_call_operand.hbm [shape: f32[2,32], index: 3, kind: output, shape index: {}]
  %s4 = sld [smem:[#allocation0]]
  $region30: #{tpu_custom_call.1} parent=0
    _
  %s6 = ssub.s32 1, %s4
  %s7 = scalar_select 0, %s6, %s4
  $region1: #{tpu_custom_call.1} parent=0
    #allocation2 [shape = 'u8[1024]{0}', space=vmem, size = 0x400, scoped, tag = 'input window, operand 0, single buffered']
    #allocation3 [shape = 's32[1]{0}', space=sflag, size = 0x4, scoped, tag = 'scoped memory for tpu_custom_call.1']
    #allocation4 [shape = 's32[1]{0}', space=sflag, size = 0x4, scoped, tag = 'scoped memory for tpu_custom_call.1']
    #allocation5 [shape = 'u8[16384]{0}', space=vmem, size = 0x4000, scoped, tag = 'input window, operand 1, single buffered']
    #allocation6 [shape = 's32[1]{0}', space=sflag, size = 0x4, scoped, tag = 'scoped memory for tpu_custom_call.1']
    #allocation7 [shape = 'u8[1024]{0}', space=vmem, size = 0x400, scoped, tag = 'output window, operand 0, single buffered']
    %8 = vsyncpa [#allocation3], 0
    %9 = vsyncpa [#allocation6], 0
    %10 = vsyncpa [#allocation4], 0
    // Predicated region
    $region2: #{tpu_custom_call.1} parent=1 // pred_check
      _
    $region3: #{tpu_custom_call.1} parent=1 // pred_check_branch
      %12 = sbr.rel (0) target = $region5
    $region4: #{tpu_custom_call.1} parent=1 // pred_region
      %s14 = ssub.s32 32, 32
      %15 = vsyncadd [#allocation3], %s14
      %s17 = sshll.u32 [#allocation2], 4
      %s18 = int_to_ptr.vmem [resolvable:$true] %s17
      %20 = dma.hbm_to_vmem [thread:$0]  %s0, 32, %s18, [#allocation3]
    $region5: #{tpu_custom_call.1} parent=1 // pred_fallthru
      _
    // Predicated region
    $region6: #{tpu_custom_call.1} parent=1 // pred_check
      _
    $region7: #{tpu_custom_call.1} parent=1 // pred_check_branch
      %22 = sbr.rel (0) target = $region9
    $region8: #{tpu_custom_call.1} parent=1 // pred_region
      %s24 = ssub.s32 512, 512
      %25 = vsyncadd [#allocation6], %s24
      %s26 = sshll.u32 [#allocation5], 4
      %s27 = int_to_ptr.vmem [resolvable:$true] %s26
      %32 = dma.hbm_to_vmem [thread:$0]  %s1, 512, %s27, [#allocation6], 128, 128, 8
    $region9: #{tpu_custom_call.1} parent=1 // pred_fallthru
      _
    // Predicated region
    $region10: #{tpu_custom_call.1} parent=1 // pred_check
      _
    $region11: #{tpu_custom_call.1} parent=1 // pred_check_branch
      %34 = sbr.rel (0) target = $region13
    $region12: #{tpu_custom_call.1} parent=1 // pred_region
      _
    $region13: #{tpu_custom_call.1} parent=1 // pred_fallthru
      _
    // Predicated region
    $region14: #{tpu_custom_call.1} parent=1 // pred_check
      _
    $region15: #{tpu_custom_call.1} parent=1 // pred_check_branch
      %36 = sbr.rel (0) target = $region17
    $region16: #{tpu_custom_call.1} parent=1 // pred_region
      %37 = dma.done [#allocation3], 32
    $region17: #{tpu_custom_call.1} parent=1 // pred_fallthru
      _
    // Predicated region
    $region18: #{tpu_custom_call.1} parent=1 // pred_check
      _
    $region19: #{tpu_custom_call.1} parent=1 // pred_check_branch
      %39 = sbr.rel (0) target = $region21
    $region20: #{tpu_custom_call.1} parent=1 // pred_region
      %40 = dma.done [#allocation6], 512
    $region21: #{tpu_custom_call.1} parent=1 // pred_fallthru
      _
    %v41 = vld [vmem:[#allocation2] sm:$0x3]
    %v42 = vld [vmem:[#allocation5] sm:$0xff]
    %v43 = vld [vmem:[#allocation5 + $0x8] sm:$0xff]
    %v44 = vld [vmem:[#allocation5 + $0x10] sm:$0xff]
    %v45 = vld [vmem:[#allocation5 + $0x18] sm:$0xff]
    %v46 = vld [vmem:[%s2] sm:$0x1]
    %v48 = vlaneseq
    %v49 = vshrl.u32 %v48, 7
    %v50 = vsub.s32 0, %v49
    %v51 = vrot.slane %v46, %v50
    %vm53 = vcmask 261120
    %v55 = vsel %vm53, %v41, 0
    %v58 = vsel %vm53, %v42, 0
    %v61 = vsel %vm53, %v43, 0
    %v64 = vsel %vm53, %v44, 0
    %v67 = vsel %vm53, %v45, 0
    %69 = vmatprep.subr.mxu0 0.0
    %v70 = vand.u32 %v58, 4294901760
    %71 = vmatpush1.xpose.msra.mxu0 %v70
    %72 = vmatprep.subr.mxu0 0.0
    %v73 = vand.u32 %v61, 4294901760
    %74 = vmatpush1.xpose.msra.mxu0 %v73
    %75 = vmatprep.subr.mxu0 0.0
    %v76 = vand.u32 %v64, 4294901760
    %77 = vmatpush1.xpose.msra.mxu0 %v76
    %78 = vmatprep.subr.mxu0 0.0
    %v79 = vand.u32 %v67, 4294901760
    %80 = vmatpush1.xpose.msra.mxu0 %v79
    %81 = vmatprep.subr.mxu0 0.0
    %82 = vmatpush1.xpose.msra.mxu0 0.0
    %83 = vmatprep.subr.mxu0 0.0
    %84 = vmatpush1.xpose.msra.mxu0 0.0
    %85 = vmatprep.subr.mxu0 0.0
    %86 = vmatpush1.xpose.msra.mxu0 0.0
    %87 = vmatprep.subr.mxu0 0.0
    %88 = vmatpush1.xpose.msra.mxu0 0.0
    %89 = vmatprep.subr.mxu0 0.0
    %90 = vmatpush1.xpose.msra.mxu0 0.0
    %91 = vmatprep.subr.mxu0 0.0
    %92 = vmatpush1.xpose.msra.mxu0 0.0
    %93 = vmatprep.subr.mxu0 0.0
    %94 = vmatpush1.xpose.msra.mxu0 0.0
    %95 = vmatprep.subr.mxu0 0.0
    %96 = vmatpush1.xpose.msra.mxu0 0.0
    %97 = vmatprep.subr.mxu0 0.0
    %98 = vmatpush1.xpose.msra.mxu0 0.0
    %99 = vmatprep.subr.mxu0 0.0
    %100 = vmatpush1.xpose.msra.mxu0 0.0
    %101 = vmatprep.subr.mxu0 0.0
    %102 = vmatpush1.xpose.msra.mxu0 0.0
    %103 = vmatprep.subr.mxu0 0.0
    %104 = vmatpush1.xpose.msra.mxu0 0.0
    %105 = vmatprep.subr.mxu0 0.0
    %106 = vmatpush1.xpose.msra.mxu0 0.0
    %107 = vmatprep.subr.mxu0 0.0
    %108 = vmatpush1.xpose.msra.mxu0 0.0
    %109 = vmatprep.subr.mxu0 0.0
    %110 = vmatpush1.xpose.msra.mxu0 0.0
    %111 = vmatprep.subr.mxu0 0.0
    %112 = vmatpush1.xpose.msra.mxu0 0.0
    %113 = vmatprep.subr.mxu0 0.0
    %114 = vmatpush1.xpose.msra.mxu0 0.0
    %115 = vmatprep.subr.mxu0 0.0
    %116 = vmatpush1.xpose.msra.mxu0 0.0
    %117 = vmatprep.subr.mxu0 0.0
    %118 = vmatpush1.xpose.msra.mxu0 0.0
    %119 = vmatprep.subr.mxu0 0.0
    %120 = vmatpush1.xpose.msra.mxu0 0.0
    %121 = vmatprep.subr.mxu0 0.0
    %122 = vmatpush1.xpose.msra.mxu0 0.0
    %123 = vmatprep.subr.mxu0 0.0
    %124 = vmatpush1.xpose.msra.mxu0 0.0
    %125 = vmatprep.subr.mxu0 0.0
    %126 = vmatpush1.xpose.msra.mxu0 0.0
    %127 = vmatprep.subr.mxu0 0.0
    %128 = vmatpush1.xpose.msra.mxu0 0.0
    %129 = vmatprep.subr.mxu0 0.0
    %130 = vmatpush1.xpose.msra.mxu0 0.0
    %131 = vmatprep.subr.mxu0 0.0
    %132 = vmatpush1.xpose.msra.mxu0 0.0
    %133 = vmatprep.subr.mxu0 0.0
    %134 = vmatpush1.xpose.msra.mxu0 0.0
    %135 = vmatprep.subr.mxu0 0.0
    %136 = vmatpush1.xpose.msra.mxu0 0.0
    %137 = vmatprep.mubr.f32.mxu0 0.0
    %v138 = vand.u32 %v55, 4294901760
    %v139 = vsub.f32 %v55, %v138
    %v140 = vand.u32 %v139, 4294901760
    %v141 = vsub.f32 %v139, %v140
    %v142 = vand.u32 %v141, 4294901760
    %143 = vmatmul.mubr.f32.gmra.mrb[0].mxu0 %v142
    %v144 = vpop.f32.mrb[0].mxu0
    %v145 = vadd.f32 %v51, %v144
    %v146 = vpop.f32.mrb[0].mxu0
    %147 = vdwg.mxu0
    %148 = vmatprep.subr.mxu0 0.0
    %v149 = vand.u32 %v58, 4294901760
    %v150 = vsub.f32 %v58, %v149
    %v151 = vand.u32 %v150, 4294901760
    %v152 = vsub.f32 %v150, %v151
    %v153 = vand.u32 %v152, 4294901760
    %154 = vmatpush1.xpose.msra.mxu0 %v153
    %155 = vmatprep.subr.mxu0 0.0
    %v156 = vand.u32 %v61, 4294901760
    %v157 = vsub.f32 %v61, %v156
    %v158 = vand.u32 %v157, 4294901760
    %v159 = vsub.f32 %v157, %v158
    %v160 = vand.u32 %v159, 4294901760
    %161 = vmatpush1.xpose.msra.mxu0 %v160
    %162 = vmatprep.subr.mxu0 0.0
    %v163 = vand.u32 %v64, 4294901760
    %v164 = vsub.f32 %v64, %v163
    %v165 = vand.u32 %v164, 4294901760
    %v166 = vsub.f32 %v164, %v165
    %v167 = vand.u32 %v166, 4294901760
    %168 = vmatpush1.xpose.msra.mxu0 %v167
    %169 = vmatprep.subr.mxu0 0.0
    %v170 = vand.u32 %v67, 4294901760
    %v171 = vsub.f32 %v67, %v170
    %v172 = vand.u32 %v171, 4294901760
    %v173 = vsub.f32 %v171, %v172
    %v174 = vand.u32 %v173, 4294901760
    %175 = vmatpush1.xpose.msra.mxu0 %v174
    %176 = vmatprep.subr.mxu0 0.0
    %177 = vmatpush1.xpose.msra.mxu0 0.0
    %178 = vmatprep.subr.mxu0 0.0
    %179 = vmatpush1.xpose.msra.mxu0 0.0
    %180 = vmatprep.subr.mxu0 0.0
    %181 = vmatpush1.xpose.msra.mxu0 0.0
    %182 = vmatprep.subr.mxu0 0.0
    %183 = vmatpush1.xpose.msra.mxu0 0.0
    %184 = vmatprep.subr.mxu0 0.0
    %185 = vmatpush1.xpose.msra.mxu0 0.0
    %186 = vmatprep.subr.mxu0 0.0
    %187 = vmatpush1.xpose.msra.mxu0 0.0
    %188 = vmatprep.subr.mxu0 0.0
    %189 = vmatpush1.xpose.msra.mxu0 0.0
    %190 = vmatprep.subr.mxu0 0.0
    %191 = vmatpush1.xpose.msra.mxu0 0.0
    %192 = vmatprep.subr.mxu0 0.0
    %193 = vmatpush1.xpose.msra.mxu0 0.0
    %194 = vmatprep.subr.mxu0 0.0
    %195 = vmatpush1.xpose.msra.mxu0 0.0
    %196 = vmatprep.subr.mxu0 0.0
    %197 = vmatpush1.xpose.msra.mxu0 0.0
    %198 = vmatprep.subr.mxu0 0.0
    %199 = vmatpush1.xpose.msra.mxu0 0.0
    %200 = vmatprep.subr.mxu0 0.0
    %201 = vmatpush1.xpose.msra.mxu0 0.0
    %202 = vmatprep.subr.mxu0 0.0
    %203 = vmatpush1.xpose.msra.mxu0 0.0
    %204 = vmatprep.subr.mxu0 0.0
    %205 = vmatpush1.xpose.msra.mxu0 0.0
    %206 = vmatprep.subr.mxu0 0.0
    %207 = vmatpush1.xpose.msra.mxu0 0.0
    %208 = vmatprep.subr.mxu0 0.0
    %209 = vmatpush1.xpose.msra.mxu0 0.0
    %210 = vmatprep.subr.mxu0 0.0
    %211 = vmatpush1.xpose.msra.mxu0 0.0
    %212 = vmatprep.subr.mxu0 0.0
    %213 = vmatpush1.xpose.msra.mxu0 0.0
    %214 = vmatprep.subr.mxu0 0.0
    %215 = vmatpush1.xpose.msra.mxu0 0.0
    %216 = vmatprep.subr.mxu0 0.0
    %217 = vmatpush1.xpose.msra.mxu0 0.0
    %218 = vmatprep.subr.mxu0 0.0
    %219 = vmatpush1.xpose.msra.mxu0 0.0
    %220 = vmatprep.subr.mxu0 0.0
    %221 = vmatpush1.xpose.msra.mxu0 0.0
    %222 = vmatprep.subr.mxu0 0.0
    %223 = vmatpush1.xpose.msra.mxu0 0.0
    %224 = vmatprep.subr.mxu0 0.0
    %225 = vmatpush1.xpose.msra.mxu0 0.0
    %226 = vmatprep.subr.mxu0 0.0
    %227 = vmatpush1.xpose.msra.mxu0 0.0
    %228 = vmatprep.subr.mxu0 0.0
    %229 = vmatpush1.xpose.msra.mxu0 0.0
    %230 = vmatprep.subr.mxu0 0.0
    %231 = vmatpush1.xpose.msra.mxu0 0.0
    %232 = vmatprep.mubr.f32.mxu0 0.0
    %v233 = vand.u32 %v55, 4294901760
    %234 = vmatmul.mubr.f32.gmra.mrb[0].mxu0 %v233
    %v235 = vpop.f32.mrb[0].mxu0
    %v236 = vadd.f32 %v145, %v235
    %v237 = vpop.f32.mrb[0].mxu0
    %238 = vdwg.mxu0
    %239 = vmatprep.subr.mxu0 0.0
    %v240 = vand.u32 %v58, 4294901760
    %v241 = vsub.f32 %v58, %v240
    %242 = vmatpush1.xpose.msra.mxu0 %v241
    %243 = vmatprep.subr.mxu0 0.0
    %v244 = vand.u32 %v61, 4294901760
    %v245 = vsub.f32 %v61, %v244
    %246 = vmatpush1.xpose.msra.mxu0 %v245
    %247 = vmatprep.subr.mxu0 0.0
    %v248 = vand.u32 %v64, 4294901760
    %v249 = vsub.f32 %v64, %v248
    %250 = vmatpush1.xpose.msra.mxu0 %v249
    %251 = vmatprep.subr.mxu0 0.0
    %v252 = vand.u32 %v67, 4294901760
    %v253 = vsub.f32 %v67, %v252
    %254 = vmatpush1.xpose.msra.mxu0 %v253
    %255 = vmatprep.subr.mxu0 0.0
    %256 = vmatpush1.xpose.msra.mxu0 0.0
    %257 = vmatprep.subr.mxu0 0.0
    %258 = vmatpush1.xpose.msra.mxu0 0.0
    %259 = vmatprep.subr.mxu0 0.0
    %260 = vmatpush1.xpose.msra.mxu0 0.0
    %261 = vmatprep.subr.mxu0 0.0
    %262 = vmatpush1.xpose.msra.mxu0 0.0
    %263 = vmatprep.subr.mxu0 0.0
    %264 = vmatpush1.xpose.msra.mxu0 0.0
    %265 = vmatprep.subr.mxu0 0.0
    %266 = vmatpush1.xpose.msra.mxu0 0.0
    %267 = vmatprep.subr.mxu0 0.0
    %268 = vmatpush1.xpose.msra.mxu0 0.0
    %269 = vmatprep.subr.mxu0 0.0
    %270 = vmatpush1.xpose.msra.mxu0 0.0
    %271 = vmatprep.subr.mxu0 0.0
    %272 = vmatpush1.xpose.msra.mxu0 0.0
    %273 = vmatprep.subr.mxu0 0.0
    %274 = vmatpush1.xpose.msra.mxu0 0.0
    %275 = vmatprep.subr.mxu0 0.0
    %276 = vmatpush1.xpose.msra.mxu0 0.0
    %277 = vmatprep.subr.mxu0 0.0
    %278 = vmatpush1.xpose.msra.mxu0 0.0
    %279 = vmatprep.subr.mxu0 0.0
    %280 = vmatpush1.xpose.msra.mxu0 0.0
    %281 = vmatprep.subr.mxu0 0.0
    %282 = vmatpush1.xpose.msra.mxu0 0.0
    %283 = vmatprep.subr.mxu0 0.0
    %284 = vmatpush1.xpose.msra.mxu0 0.0
    %285 = vmatprep.subr.mxu0 0.0
    %286 = vmatpush1.xpose.msra.mxu0 0.0
    %287 = vmatprep.subr.mxu0 0.0
    %288 = vmatpush1.xpose.msra.mxu0 0.0
    %289 = vmatprep.subr.mxu0 0.0
    %290 = vmatpush1.xpose.msra.mxu0 0.0
    %291 = vmatprep.subr.mxu0 0.0
    %292 = vmatpush1.xpose.msra.mxu0 0.0
    %293 = vmatprep.subr.mxu0 0.0
    %294 = vmatpush1.xpose.msra.mxu0 0.0
    %295 = vmatprep.subr.mxu0 0.0
    %296 = vmatpush1.xpose.msra.mxu0 0.0
    %297 = vmatprep.subr.mxu0 0.0
    %298 = vmatpush1.xpose.msra.mxu0 0.0
    %299 = vmatprep.subr.mxu0 0.0
    %300 = vmatpush1.xpose.msra.mxu0 0.0
    %301 = vmatprep.subr.mxu0 0.0
    %302 = vmatpush1.xpose.msra.mxu0 0.0
    %303 = vmatprep.subr.mxu0 0.0
    %304 = vmatpush1.xpose.msra.mxu0 0.0
    %305 = vmatprep.subr.mxu0 0.0
    %306 = vmatpush1.xpose.msra.mxu0 0.0
    %307 = vmatprep.subr.mxu0 0.0
    %308 = vmatpush1.xpose.msra.mxu0 0.0
    %309 = vmatprep.subr.mxu0 0.0
    %310 = vmatpush1.xpose.msra.mxu0 0.0
    %311 = vmatprep.mubr.f32.mxu0 0.0
    %v312 = vand.u32 %v55, 4294901760
    %v313 = vsub.f32 %v55, %v312
    %314 = vmatmul.mubr.f32.gmra.mrb[0].mxu0 %v313
    %v315 = vpop.f32.mrb[0].mxu0
    %v316 = vadd.f32 %v236, %v315
    %v317 = vpop.f32.mrb[0].mxu0
    %318 = vdwg.mxu0
    %319 = vmatprep.subr.mxu0 0.0
    %v320 = vand.u32 %v58, 4294901760
    %321 = vmatpush1.xpose.msra.mxu0 %v320
    %322 = vmatprep.subr.mxu0 0.0
    %v323 = vand.u32 %v61, 4294901760
    %324 = vmatpush1.xpose.msra.mxu0 %v323
    %325 = vmatprep.subr.mxu0 0.0
    %v326 = vand.u32 %v64, 4294901760
    %327 = vmatpush1.xpose.msra.mxu0 %v326
    %328 = vmatprep.subr.mxu0 0.0
    %v329 = vand.u32 %v67, 4294901760
    %330 = vmatpush1.xpose.msra.mxu0 %v329
    %331 = vmatprep.subr.mxu0 0.0
    %332 = vmatpush1.xpose.msra.mxu0 0.0
    %333 = vmatprep.subr.mxu0 0.0
    %334 = vmatpush1.xpose.msra.mxu0 0.0
    %335 = vmatprep.subr.mxu0 0.0
    %336 = vmatpush1.xpose.msra.mxu0 0.0
    %337 = vmatprep.subr.mxu0 0.0
    %338 = vmatpush1.xpose.msra.mxu0 0.0
    %339 = vmatprep.subr.mxu0 0.0
    %340 = vmatpush1.xpose.msra.mxu0 0.0
    %341 = vmatprep.subr.mxu0 0.0
    %342 = vmatpush1.xpose.msra.mxu0 0.0
    %343 = vmatprep.subr.mxu0 0.0
    %344 = vmatpush1.xpose.msra.mxu0 0.0
    %345 = vmatprep.subr.mxu0 0.0
    %346 = vmatpush1.xpose.msra.mxu0 0.0
    %347 = vmatprep.subr.mxu0 0.0
    %348 = vmatpush1.xpose.msra.mxu0 0.0
    %349 = vmatprep.subr.mxu0 0.0
    %350 = vmatpush1.xpose.msra.mxu0 0.0
    %351 = vmatprep.subr.mxu0 0.0
    %352 = vmatpush1.xpose.msra.mxu0 0.0
    %353 = vmatprep.subr.mxu0 0.0
    %354 = vmatpush1.xpose.msra.mxu0 0.0
    %355 = vmatprep.subr.mxu0 0.0
    %356 = vmatpush1.xpose.msra.mxu0 0.0
    %357 = vmatprep.subr.mxu0 0.0
    %358 = vmatpush1.xpose.msra.mxu0 0.0
    %359 = vmatprep.subr.mxu0 0.0
    %360 = vmatpush1.xpose.msra.mxu0 0.0
    %361 = vmatprep.subr.mxu0 0.0
    %362 = vmatpush1.xpose.msra.mxu0 0.0
    %363 = vmatprep.subr.mxu0 0.0
    %364 = vmatpush1.xpose.msra.mxu0 0.0
    %365 = vmatprep.subr.mxu0 0.0
    %366 = vmatpush1.xpose.msra.mxu0 0.0
    %367 = vmatprep.subr.mxu0 0.0
    %368 = vmatpush1.xpose.msra.mxu0 0.0
    %369 = vmatprep.subr.mxu0 0.0
    %370 = vmatpush1.xpose.msra.mxu0 0.0
    %371 = vmatprep.subr.mxu0 0.0
    %372 = vmatpush1.xpose.msra.mxu0 0.0
    %373 = vmatprep.subr.mxu0 0.0
    %374 = vmatpush1.xpose.msra.mxu0 0.0
    %375 = vmatprep.subr.mxu0 0.0
    %376 = vmatpush1.xpose.msra.mxu0 0.0
    %377 = vmatprep.subr.mxu0 0.0
    %378 = vmatpush1.xpose.msra.mxu0 0.0
    %379 = vmatprep.subr.mxu0 0.0
    %380 = vmatpush1.xpose.msra.mxu0 0.0
    %381 = vmatprep.subr.mxu0 0.0
    %382 = vmatpush1.xpose.msra.mxu0 0.0
    %383 = vmatprep.subr.mxu0 0.0
    %384 = vmatpush1.xpose.msra.mxu0 0.0
    %385 = vmatprep.subr.mxu0 0.0
    %386 = vmatpush1.xpose.msra.mxu0 0.0
    %387 = vmatprep.mubr.f32.mxu0 0.0
    %v388 = vand.u32 %v55, 4294901760
    %v389 = vsub.f32 %v55, %v388
    %v390 = vand.u32 %v389, 4294901760
    %391 = vmatmul.mubr.f32.gmra.mrb[0].mxu0 %v390
    %v392 = vpop.f32.mrb[0].mxu0
    %v393 = vadd.f32 %v316, %v392
    %v394 = vpop.f32.mrb[0].mxu0
    %395 = vdwg.mxu0
    %396 = vmatprep.subr.mxu0 0.0
    %v397 = vand.u32 %v58, 4294901760
    %v398 = vsub.f32 %v58, %v397
    %v399 = vand.u32 %v398, 4294901760
    %400 = vmatpush1.xpose.msra.mxu0 %v399
    %401 = vmatprep.subr.mxu0 0.0
    %v402 = vand.u32 %v61, 4294901760
    %v403 = vsub.f32 %v61, %v402
    %v404 = vand.u32 %v403, 4294901760
    %405 = vmatpush1.xpose.msra.mxu0 %v404
    %406 = vmatprep.subr.mxu0 0.0
    %v407 = vand.u32 %v64, 4294901760
    %v408 = vsub.f32 %v64, %v407
    %v409 = vand.u32 %v408, 4294901760
    %410 = vmatpush1.xpose.msra.mxu0 %v409
    %411 = vmatprep.subr.mxu0 0.0
    %v412 = vand.u32 %v67, 4294901760
    %v413 = vsub.f32 %v67, %v412
    %v414 = vand.u32 %v413, 4294901760
    %415 = vmatpush1.xpose.msra.mxu0 %v414
    %416 = vmatprep.subr.mxu0 0.0
    %417 = vmatpush1.xpose.msra.mxu0 0.0
    %418 = vmatprep.subr.mxu0 0.0
    %419 = vmatpush1.xpose.msra.mxu0 0.0
    %420 = vmatprep.subr.mxu0 0.0
    %421 = vmatpush1.xpose.msra.mxu0 0.0
    %422 = vmatprep.subr.mxu0 0.0
    %423 = vmatpush1.xpose.msra.mxu0 0.0
    %424 = vmatprep.subr.mxu0 0.0
    %425 = vmatpush1.xpose.msra.mxu0 0.0
    %426 = vmatprep.subr.mxu0 0.0
    %427 = vmatpush1.xpose.msra.mxu0 0.0
    %428 = vmatprep.subr.mxu0 0.0
    %429 = vmatpush1.xpose.msra.mxu0 0.0
    %430 = vmatprep.subr.mxu0 0.0
    %431 = vmatpush1.xpose.msra.mxu0 0.0
    %432 = vmatprep.subr.mxu0 0.0
    %433 = vmatpush1.xpose.msra.mxu0 0.0
    %434 = vmatprep.subr.mxu0 0.0
    %435 = vmatpush1.xpose.msra.mxu0 0.0
    %436 = vmatprep.subr.mxu0 0.0
    %437 = vmatpush1.xpose.msra.mxu0 0.0
    %438 = vmatprep.subr.mxu0 0.0
    %439 = vmatpush1.xpose.msra.mxu0 0.0
    %440 = vmatprep.subr.mxu0 0.0
    %441 = vmatpush1.xpose.msra.mxu0 0.0
    %442 = vmatprep.subr.mxu0 0.0
    %443 = vmatpush1.xpose.msra.mxu0 0.0
    %444 = vmatprep.subr.mxu0 0.0
    %445 = vmatpush1.xpose.msra.mxu0 0.0
    %446 = vmatprep.subr.mxu0 0.0
    %447 = vmatpush1.xpose.msra.mxu0 0.0
    %448 = vmatprep.subr.mxu0 0.0
    %449 = vmatpush1.xpose.msra.mxu0 0.0
    %450 = vmatprep.subr.mxu0 0.0
    %451 = vmatpush1.xpose.msra.mxu0 0.0
    %452 = vmatprep.subr.mxu0 0.0
    %453 = vmatpush1.xpose.msra.mxu0 0.0
    %454 = vmatprep.subr.mxu0 0.0
    %455 = vmatpush1.xpose.msra.mxu0 0.0
    %456 = vmatprep.subr.mxu0 0.0
    %457 = vmatpush1.xpose.msra.mxu0 0.0
    %458 = vmatprep.subr.mxu0 0.0
    %459 = vmatpush1.xpose.msra.mxu0 0.0
    %460 = vmatprep.subr.mxu0 0.0
    %461 = vmatpush1.xpose.msra.mxu0 0.0
    %462 = vmatprep.subr.mxu0 0.0
    %463 = vmatpush1.xpose.msra.mxu0 0.0
    %464 = vmatprep.subr.mxu0 0.0
    %465 = vmatpush1.xpose.msra.mxu0 0.0
    %466 = vmatprep.subr.mxu0 0.0
    %467 = vmatpush1.xpose.msra.mxu0 0.0
    %468 = vmatprep.subr.mxu0 0.0
    %469 = vmatpush1.xpose.msra.mxu0 0.0
    %470 = vmatprep.subr.mxu0 0.0
    %471 = vmatpush1.xpose.msra.mxu0 0.0
    %472 = vmatprep.mubr.f32.mxu0 0.0
    %v473 = vand.u32 %v55, 4294901760
    %474 = vmatmul.mubr.f32.gmra.mrb[0].mxu0 %v473
    %v475 = vpop.f32.mrb[0].mxu0
    %v476 = vadd.f32 %v393, %v475
    %v477 = vpop.f32.mrb[0].mxu0
    %478 = vdwg.mxu0
    %479 = vmatprep.subr.mxu0 0.0
    %v480 = vand.u32 %v58, 4294901760
    %481 = vmatpush1.xpose.msra.mxu0 %v480
    %482 = vmatprep.subr.mxu0 0.0
    %v483 = vand.u32 %v61, 4294901760
    %484 = vmatpush1.xpose.msra.mxu0 %v483
    %485 = vmatprep.subr.mxu0 0.0
    %v486 = vand.u32 %v64, 4294901760
    %487 = vmatpush1.xpose.msra.mxu0 %v486
    %488 = vmatprep.subr.mxu0 0.0
    %v489 = vand.u32 %v67, 4294901760
    %490 = vmatpush1.xpose.msra.mxu0 %v489
    %491 = vmatprep.subr.mxu0 0.0
    %492 = vmatpush1.xpose.msra.mxu0 0.0
    %493 = vmatprep.subr.mxu0 0.0
    %494 = vmatpush1.xpose.msra.mxu0 0.0
    %495 = vmatprep.subr.mxu0 0.0
    %496 = vmatpush1.xpose.msra.mxu0 0.0
    %497 = vmatprep.subr.mxu0 0.0
    %498 = vmatpush1.xpose.msra.mxu0 0.0
    %499 = vmatprep.subr.mxu0 0.0
    %500 = vmatpush1.xpose.msra.mxu0 0.0
    %501 = vmatprep.subr.mxu0 0.0
    %502 = vmatpush1.xpose.msra.mxu0 0.0
    %503 = vmatprep.subr.mxu0 0.0
    %504 = vmatpush1.xpose.msra.mxu0 0.0
    %505 = vmatprep.subr.mxu0 0.0
    %506 = vmatpush1.xpose.msra.mxu0 0.0
    %507 = vmatprep.subr.mxu0 0.0
    %508 = vmatpush1.xpose.msra.mxu0 0.0
    %509 = vmatprep.subr.mxu0 0.0
    %510 = vmatpush1.xpose.msra.mxu0 0.0
    %511 = vmatprep.subr.mxu0 0.0
    %512 = vmatpush1.xpose.msra.mxu0 0.0
    %513 = vmatprep.subr.mxu0 0.0
    %514 = vmatpush1.xpose.msra.mxu0 0.0
    %515 = vmatprep.subr.mxu0 0.0
    %516 = vmatpush1.xpose.msra.mxu0 0.0
    %517 = vmatprep.subr.mxu0 0.0
    %518 = vmatpush1.xpose.msra.mxu0 0.0
    %519 = vmatprep.subr.mxu0 0.0
    %520 = vmatpush1.xpose.msra.mxu0 0.0
    %521 = vmatprep.subr.mxu0 0.0
    %522 = vmatpush1.xpose.msra.mxu0 0.0
    %523 = vmatprep.subr.mxu0 0.0
    %524 = vmatpush1.xpose.msra.mxu0 0.0
    %525 = vmatprep.subr.mxu0 0.0
    %526 = vmatpush1.xpose.msra.mxu0 0.0
    %527 = vmatprep.subr.mxu0 0.0
    %528 = vmatpush1.xpose.msra.mxu0 0.0
    %529 = vmatprep.subr.mxu0 0.0
    %530 = vmatpush1.xpose.msra.mxu0 0.0
    %531 = vmatprep.subr.mxu0 0.0
    %532 = vmatpush1.xpose.msra.mxu0 0.0
    %533 = vmatprep.subr.mxu0 0.0
    %534 = vmatpush1.xpose.msra.mxu0 0.0
    %535 = vmatprep.subr.mxu0 0.0
    %536 = vmatpush1.xpose.msra.mxu0 0.0
    %537 = vmatprep.subr.mxu0 0.0
    %538 = vmatpush1.xpose.msra.mxu0 0.0
    %539 = vmatprep.subr.mxu0 0.0
    %540 = vmatpush1.xpose.msra.mxu0 0.0
    %541 = vmatprep.subr.mxu0 0.0
    %542 = vmatpush1.xpose.msra.mxu0 0.0
    %543 = vmatprep.subr.mxu0 0.0
    %544 = vmatpush1.xpose.msra.mxu0 0.0
    %545 = vmatprep.subr.mxu0 0.0
    %546 = vmatpush1.xpose.msra.mxu0 0.0
    %547 = vmatprep.mubr.f32.mxu0 0.0
    %v548 = vand.u32 %v55, 4294901760
    %549 = vmatmul.mubr.f32.gmra.mrb[0].mxu0 %v548
    %v550 = vpop.f32.mrb[0].mxu0
    %v551 = vadd.f32 %v476, %v550
    %v552 = vpop.f32.mrb[0].mxu0
    %553 = vdwg.mxu0
    %v554 = vtanh.pop %v551
    %vm555 = vcmask 254976
    %556 = vst.msk [vmem:[#allocation7] sm:$0x3] %vm555, %v554
    // Predicated region
    $region22: #{tpu_custom_call.1} parent=1 // pred_check
      _
    $region23: #{tpu_custom_call.1} parent=1 // pred_check_branch
      %558 = sbr.rel (0) target = $region25
    $region24: #{tpu_custom_call.1} parent=1 // pred_region
      %s560 = ssub.s32 32, 32
      %561 = vsyncadd [#allocation4], %s560
      %s563 = sshll.u32 [#allocation7], 4
      %s564 = int_to_ptr.vmem [resolvable:$true] %s563
      %566 = dma.vmem_to_hbm [thread:$0]  %s564, 32, %s3, [#allocation4]
    $region25: #{tpu_custom_call.1} parent=1 // pred_fallthru
      _
    // Predicated region
    $region26: #{tpu_custom_call.1} parent=1 // pred_check
      _
    $region27: #{tpu_custom_call.1} parent=1 // pred_check_branch
      %568 = sbr.rel (0) target = $region29
    $region28: #{tpu_custom_call.1} parent=1 // pred_region
      %569 = dma.done [#allocation4], 32
    $region29: #{tpu_custom_call.1} parent=1 // pred_fallthru
      _
    %570 = vsyncpa [#allocation3], 1
    %571 = vsyncpa [#allocation6], 1
    %572 = vsyncpa [#allocation4], 1

</llo_original>
